<compile_context>
chip_gen: v5e
topology: v5e:2x2
jax: 0.10.0
libtpu: 0.0.40
codegen_flags: <defaults>
</compile_context>

<pallas_src>
import functools

import jax
import jax.numpy as jnp
from jax.experimental import pallas as pl
from jax.experimental.pallas import tpu as pltpu

EPS = 1e-5


def _vmem_limit_bytes():
    """Generation-aware VMEM limit: ~3/4 of physical, capped at 96 MiB.
    v7x (64 MiB physical) -> 48 MiB; v5e/v6e (128 MiB) -> 96 MiB."""
    phys = 128 * 1024 * 1024
    try:
        phys = int(pltpu.get_tpu_info().vmem_capacity_bytes)
    except Exception:
        pass
    return min((phys * 3) // 4, 96 * 1024 * 1024)


def _choose_tile(hw, cin, chid, cout, x_isize, out_isize, vmem_limit, n_batch):
    """VMEM-aware pixel-tile size. Returns (T, padded_HW)."""
    if hw < 128:
        return hw, hw  # full-extent block (legal: equals array dim)

    # Per-pixel VMEM footprint: double-buffered x + out blocks + f32 intermediates.
    per_px = 2 * cin * x_isize + 2 * cout * out_isize + (2 * chid + 2 * cout) * 4
    budget = int(vmem_limit * 0.8)
    t_max = max(128, min(8192, (budget // per_px) // 128 * 128))

    t = 0
    if hw % 128 == 0:
        if hw <= t_max:
            t = hw
        else:
            for k in range(t_max // 128, 0, -1):  # largest mult-of-128 divisor that fits
                if hw % (k * 128) == 0:
                    t = k * 128
                    break

    if t >= min(512, hw) and hw % t == 0:
        hw_pad = hw
    else:
        # Awkward HW: pad to a multiple of a well-sized tile (costs one extra pass over
        # x in the wrapper; only taken when no decent divisor exists).
        n_t = -(-hw // t_max)
        t = ((-(-hw // n_t) + 127) // 128) * 128
        hw_pad = n_t * t

    # Keep >= 2 grid steps so both v7x TensorCores get work.
    while n_batch * (hw_pad // t) < 2 and t % 256 == 0 and t > 128:
        t //= 2
    return t, hw_pad


def _x_block_spec(cin, t, num_tiles):
    """x input spec; 3-deep buffering only when tiles are small & numerous (DMA-latency)."""
    idx = lambda n, j: (n, 0, j)
    if t <= 512 and num_tiles >= 4:
        try:
            return pl.BlockSpec((None, cin, t), idx, pipeline_mode=pl.Buffered(3))
        except TypeError:  # older jax without pipeline_mode kwarg
            pass
    return pl.BlockSpec((None, cin, t), idx)


# ---------------------------------------------------------------------------
# Pass 1: per-channel batch statistics of h = c1_w @ x (bias omitted: cancels in BN).
# Output block (Chid, 2) is a VMEM-resident accumulator across the tile axis.
# ---------------------------------------------------------------------------
def _stats_kernel(x_ref, w1_ref, o_ref):
    @pl.when(pl.program_id(1) == 0)
    def _():
        o_ref[...] = jnp.zeros_like(o_ref)

    x = x_ref[...]
    if x.dtype != w1_ref.dtype:
        x = x.astype(w1_ref.dtype)  # per-tile cast (no wrapper-side HBM pass)
    h = jnp.dot(w1_ref[...], x, preferred_element_type=jnp.float32)       # (Chid, T)
    s1 = jnp.sum(h, axis=1, keepdims=True)                                # (Chid, 1)
    s2 = jnp.sum(h * h, axis=1, keepdims=True)                            # (Chid, 1)
    o_ref[...] += jnp.concatenate([s1, s2], axis=1)                       # (Chid, 2)


# ---------------------------------------------------------------------------
# Pass 2: fused normalize + ReLU + second conv + residual conv + biases.
# wcat = concat([c1_w, res_w]) so the x tile feeds one MXU pass.
# ---------------------------------------------------------------------------
def _res_block_kernel(x_ref, wcat_ref, scale_ref, shift_ref, w2_ref, b_ref, o_ref, *, chid):
    x = x_ref[...]
    if x.dtype != wcat_ref.dtype:
        x = x.astype(wcat_ref.dtype)
    hr = jnp.dot(wcat_ref[...], x, preferred_element_type=jnp.float32)    # (Chid+Cout, T)
    hn = jnp.maximum(hr[:chid] * scale_ref[...] + shift_ref[...], 0.0)    # folded BN + ReLU
    main = jnp.dot(w2_ref[...], hn.astype(w2_ref.dtype),
                   preferred_element_type=jnp.float32)                    # (Cout, T)
    o_ref[...] = (main + hr[chid:] + b_ref[...]).astype(o_ref.dtype)


def res_block_forward(x_nchw, c1_w, c1_b, gamma, beta, c2_w, c2_b, res_w, res_b,
                      *, matmul_dtype=None, out_dtype=jnp.float32):
    """Forward pass of res_block. Weights are squeezed 1x1 conv kernels (out_c, in_c).

    matmul_dtype=None -> matmuls run in x's resident dtype (weights cast host-side, tiny).
    If matmul_dtype differs from x.dtype, x tiles are cast inside the kernel (no extra
    HBM pass over x). out_dtype controls the emitted output dtype (bf16 halves writes)."""
    del c1_b  # cancels exactly under training-mode BatchNorm (mean subtraction)

    N, Cin, H, W = x_nchw.shape
    Chid = c1_w.shape[0]
    Cout = c2_w.shape[0]
    HW = H * W

    mm_dtype = jnp.dtype(matmul_dtype) if matmul_dtype is not None else x_nchw.dtype
    x_isize = jnp.dtype(x_nchw.dtype).itemsize
    out_isize = jnp.dtype(out_dtype).itemsize
    mm_isize = jnp.dtype(mm_dtype).itemsize

    vmem_limit = _vmem_limit_bytes()
    T, HW_pad = _choose_tile(HW, Cin, Chid, Cout, x_isize, out_isize, vmem_limit, N)
    num_tiles = HW_pad // T

    # Channels-first, pixels-on-lanes; zero-copy reshape from NCHW. x keeps its resident
    # dtype — no wrapper-side astype, no extra HBM pass.
    x3 = x_nchw.reshape(N, Cin, HW)
    if HW_pad != HW:
        x3 = jnp.pad(x3, ((0, 0), (0, 0), (0, HW_pad - HW)))  # only for awkward HW shapes

    w1 = c1_w.reshape(Chid, Cin).astype(mm_dtype)
    w2 = c2_w.reshape(Cout, Chid).astype(mm_dtype)
    wr = res_w.reshape(Cout, Cin).astype(mm_dtype)
    wcat = jnp.concatenate([w1, wr], axis=0)                  # (Chid+Cout, Cin)

    x_spec = _x_block_spec(Cin, T, num_tiles)

    # ---------------- Pass 1: batch statistics (in-kernel tile accumulation) ----------
    stats_bytes = x3.size * x_isize + w1.size * mm_isize + N * Chid * 2 * 4
    stats_flops = 2 * N * HW_pad * Cin * Chid + 4 * N * HW_pad * Chid
    partial = pl.pallas_call(
        _stats_kernel,
        out_shape=jax.ShapeDtypeStruct((N, Chid, 2), jnp.float32),
        grid=(N, num_tiles),
        in_specs=[
            x_spec,
            pl.BlockSpec((Chid, Cin), lambda n, j: (0, 0)),   # VMEM-resident weight
        ],
        out_specs=pl.BlockSpec((None, Chid, 2), lambda n, j: (n, 0, 0)),  # resident accumulator
        compiler_params=pltpu.CompilerParams(
            dimension_semantics=("parallel", "arbitrary"),
            vmem_limit_bytes=vmem_limit),
        cost_estimate=pl.CostEstimate(flops=int(stats_flops), transcendentals=0,
                                      bytes_accessed=int(stats_bytes)),
    )(x3, w1)

    sums = jnp.sum(partial, axis=0)                           # (Chid, 2), tiny reduce over N
    m = float(N * HW)                                         # zero-padded pixels contribute 0
    mean = sums[:, 0] / m
    var = jnp.maximum(sums[:, 1] / m - mean * mean, 0.0)      # biased variance, like PyTorch BN
    inv = jax.lax.rsqrt(var + EPS)
    g = gamma.reshape(Chid).astype(jnp.float32)
    b = beta.reshape(Chid).astype(jnp.float32)
    scale = (g * inv).reshape(Chid, 1)
    shift = (b - mean * g * inv).reshape(Chid, 1)
    bias = (c2_b.reshape(Cout) + res_b.reshape(Cout)).astype(jnp.float32).reshape(Cout, 1)

    # ---------------- Pass 2: fused main + residual branch ----------------------------
    main_flops = 2 * N * HW_pad * (Cin * (Chid + Cout) + Chid * Cout) + 6 * N * HW_pad * Chid
    main_bytes = (x3.size * x_isize + N * Cout * HW_pad * out_isize
                  + (wcat.size + w2.size) * mm_isize + (2 * Chid + Cout) * 4)
    out3 = pl.pallas_call(
        functools.partial(_res_block_kernel, chid=Chid),
        out_shape=jax.ShapeDtypeStruct((N, Cout, HW_pad), out_dtype),
        grid=(N, num_tiles),
        in_specs=[
            x_spec,
            pl.BlockSpec((Chid + Cout, Cin), lambda n, j: (0, 0)),
            pl.BlockSpec((Chid, 1), lambda n, j: (0, 0)),
            pl.BlockSpec((Chid, 1), lambda n, j: (0, 0)),
            pl.BlockSpec((Cout, Chid), lambda n, j: (0, 0)),
            pl.BlockSpec((Cout, 1), lambda n, j: (0, 0)),
        ],
        out_specs=pl.BlockSpec((None, Cout, T), lambda n, j: (n, 0, j)),
        compiler_params=pltpu.CompilerParams(
            dimension_semantics=("parallel", "parallel"),
            vmem_limit_bytes=vmem_limit),
        cost_estimate=pl.CostEstimate(flops=int(main_flops), transcendentals=0,
                                      bytes_accessed=int(main_bytes)),
    )(x3, wcat, scale, shift, w2, bias)

    if HW_pad != HW:
        out3 = out3[:, :, :HW]
    return out3.reshape(N, Cout, H, W)


def reference_forward(x, c1_w, c1_b, gamma, beta, c2_w, c2_b, res_w, res_b):
    """Pure-JAX reference with identical semantics (training-mode BN, biased variance)."""
    N, Cin, H, W = x.shape
    x2 = x.reshape(N, Cin, H * W).astype(jnp.float32)
    h = jnp.einsum("oc,ncm->nom", c1_w, x2) + c1_b[None, :, None]
    mean = jnp.mean(h, axis=(0, 2), keepdims=True)
    var = jnp.mean((h - mean) ** 2, axis=(0, 2), keepdims=True)
    hn = (h - mean) / jnp.sqrt(var + EPS) * gamma[None, :, None] + beta[None, :, None]
    hn = jnp.maximum(hn, 0.0)
    out = jnp.einsum("oc,ncm->nom", c2_w, hn) + c2_b[None, :, None]
    r = jnp.einsum("oc,ncm->nom", res_w, x2) + res_b[None, :, None]
    return (out + r).reshape(N, -1, H, W)


if __name__ == "__main__":
    N, in_c, med_c, out_c, H, W = 2, 64, 32, 16, 16, 16

    key = jax.random.PRNGKey(0)
    ks = jax.random.split(key, 8)
    x = jax.random.normal(ks[0], (N, in_c, H, W), dtype=jnp.float32)
    c1_w = jax.random.normal(ks[1], (med_c, in_c), dtype=jnp.float32) * 0.1
    c1_b = jax.random.normal(ks[2], (med_c,), dtype=jnp.float32) * 0.1
    gamma = jax.random.normal(ks[3], (med_c,), dtype=jnp.float32) * 0.2 + 1.0
    beta = jax.random.normal(ks[4], (med_c,), dtype=jnp.float32) * 0.1
    c2_w = jax.random.normal(ks[5], (out_c, med_c), dtype=jnp.float32) * 0.1
    c2_b = jax.random.normal(ks[6], (out_c,), dtype=jnp.float32) * 0.1
    res_w = jax.random.normal(ks[7], (out_c, in_c), dtype=jnp.float32) * 0.1
    res_b = jnp.linspace(-0.1, 0.1, out_c, dtype=jnp.float32)

    ref = reference_forward(x, c1_w, c1_b, gamma, beta, c2_w, c2_b, res_w, res_b)

    # f32 path (default: matmuls in x's resident dtype, f32 output)
    out = res_block_forward(x, c1_w, c1_b, gamma, beta, c2_w, c2_b, res_w, res_b)
    out = jax.block_until_ready(out)
    assert out.shape == (N, out_c, H, W), out.shape
    assert jnp.allclose(out, ref, atol=1e-4, rtol=1e-4), "f32 mismatch vs reference"

    # bf16-resident-x path (applies to v5e/v6e/v7x MXUs; halves x read traffic only
    # when the producer already emits bf16). Stats / BN math stay f32; bf16 output.
    x_bf16 = x.astype(jnp.bfloat16)  # simulates a bf16-resident producer
    out_bf16 = res_block_forward(x_bf16, c1_w, c1_b, gamma, beta, c2_w, c2_b, res_w, res_b,
                                 out_dtype=jnp.bfloat16)
    out_bf16 = jax.block_until_ready(out_bf16)
    err = float(jnp.max(jnp.abs(out_bf16.astype(jnp.float32) - ref)))
    assert err < 0.5, f"bf16 path diverged: max abs err {err}"

    print("KERNEL_OK")
</pallas_src>

<mosaic_0001>
module attributes {stable_mosaic.version = 11 : i64} {
  func.func @_stats_kernel(%arg0: i32, %arg1: i32, %arg2: memref<1x64x256xf32, #tpu.memory_space<vmem>>, %arg3: memref<32x64xf32, #tpu.memory_space<vmem>>, %arg4: memref<1x32x2xf32, #tpu.memory_space<vmem>>) attributes {dimension_semantics = [#tpu.dimension_semantics<parallel>, #tpu.dimension_semantics<arbitrary>], iteration_bounds = array<i64: 2, 1>, scalar_prefetch = 0 : i64, scratch_operands = 0 : i64, tpu.core_type = #tpu.core_type<tc>, window_params = [{transform_indices = @transform_0, window_bounds = array<i64: 1, 64, 256>}, {pipeline_mode = #tpu.pipeline_mode<synchronous>, transform_indices = @transform_1, window_bounds = array<i64: 32, 64>}, {transform_indices = @transform_2, window_bounds = array<i64: 1, 32, 2>}]} {
    %c0_i32 = arith.constant 0 : i32
    %0 = arith.cmpi eq, %arg1, %c0_i32 : i32
    %1 = arith.extui %0 : i1 to i32
    %c0_i32_0 = arith.constant 0 : i32
    %2 = arith.cmpi ne, %1, %c0_i32_0 : i32
    scf.if %2 {
      %cst_13 = arith.constant 0.000000e+00 : f32
      %19 = vector.broadcast %cst_13 : f32 to vector<32x2xf32>
      %c0_14 = arith.constant 0 : index
      %c0_15 = arith.constant 0 : index
      %c0_16 = arith.constant 0 : index
      %20 = vector.load %arg4[%c0_14, %c0_15, %c0_16] : memref<1x32x2xf32, #tpu.memory_space<vmem>>, vector<1x32x2xf32>
      %21 = vector.shape_cast %20 : vector<1x32x2xf32> to vector<32x2xf32>
      %22 = vector.shape_cast %19 : vector<32x2xf32> to vector<1x32x2xf32>
      tpu.vector_store %arg4[%c0_14, %c0_15, %c0_16], %22 {strides = array<i32>} : memref<1x32x2xf32, #tpu.memory_space<vmem>>, vector<1x32x2xf32>,
    } else {
    }
    %c0 = arith.constant 0 : index
    %c0_1 = arith.constant 0 : index
    %c0_2 = arith.constant 0 : index
    %3 = vector.load %arg2[%c0, %c0_1, %c0_2] : memref<1x64x256xf32, #tpu.memory_space<vmem>>, vector<1x64x256xf32>
    %4 = vector.shape_cast %3 : vector<1x64x256xf32> to vector<64x256xf32>
    %c0_3 = arith.constant 0 : index
    %c0_4 = arith.constant 0 : index
    %5 = vector.load %arg3[%c0_3, %c0_4] : memref<32x64xf32, #tpu.memory_space<vmem>>, vector<32x64xf32>
    %cst = arith.constant dense<0.000000e+00> : vector<32x256xf32>
    %6 = tpu.matmul %5, %4, %cst {dimension_numbers = #tpu.dot_dimension_numbers<[1], [0], [0], [1], [0, 0, 1, 1], [], []>} : vector<32x64xf32>, vector<64x256xf32>, vector<32x256xf32> -> vector<32x256xf32>
    %cst_5 = arith.constant dense<0.000000e+00> : vector<32xf32>
    %7 = vector.multi_reduction <add>, %6, %cst_5 [1] : vector<32x256xf32> to vector<32xf32>
    %8 = vector.shape_cast %7 : vector<32xf32> to vector<32x1xf32>
    %9 = arith.mulf %6, %6 : vector<32x256xf32>
    %cst_6 = arith.constant dense<0.000000e+00> : vector<32xf32>
    %10 = vector.multi_reduction <add>, %9, %cst_6 [1] : vector<32x256xf32> to vector<32xf32>
    %11 = vector.shape_cast %10 : vector<32xf32> to vector<32x1xf32>
    %c0_7 = arith.constant 0 : index
    %c0_8 = arith.constant 0 : index
    %c0_9 = arith.constant 0 : index
    %12 = vector.load %arg4[%c0_7, %c0_8, %c0_9] : memref<1x32x2xf32, #tpu.memory_space<vmem>>, vector<1x32x2xf32>
    %13 = vector.shape_cast %12 : vector<1x32x2xf32> to vector<32x2xf32>
    %14 = tpu.concatenate %8, %11 in 1 : vector<32x1xf32>, vector<32x1xf32> -> vector<32x2xf32>
    %15 = arith.addf %13, %14 : vector<32x2xf32>
    %c0_10 = arith.constant 0 : index
    %c0_11 = arith.constant 0 : index
    %c0_12 = arith.constant 0 : index
    %16 = vector.load %arg4[%c0_10, %c0_11, %c0_12] : memref<1x32x2xf32, #tpu.memory_space<vmem>>, vector<1x32x2xf32>
    %17 = vector.shape_cast %16 : vector<1x32x2xf32> to vector<32x2xf32>
    %18 = vector.shape_cast %15 : vector<32x2xf32> to vector<1x32x2xf32>
    tpu.vector_store %arg4[%c0_10, %c0_11, %c0_12], %18 {strides = array<i32>} : memref<1x32x2xf32, #tpu.memory_space<vmem>>, vector<1x32x2xf32>,
    return
  }
  func.func @transform_0(%arg0: i32, %arg1: i32) -> (i32, i32, i32) {
    %c0_i32 = arith.constant 0 : i32
    %c0_i32_0 = arith.constant 0 : i32
    return %arg0, %c0_i32, %arg1 : i32, i32, i32
  }
  func.func @transform_1(%arg0: i32, %arg1: i32) -> (i32, i32) {
    %c0_i32 = arith.constant 0 : i32
    %c0_i32_0 = arith.constant 0 : i32
    %c0_i32_1 = arith.constant 0 : i32
    return %c0_i32, %c0_i32_0 : i32, i32
  }
  func.func @transform_2(%arg0: i32, %arg1: i32) -> (i32, i32, i32) {
    %c0_i32 = arith.constant 0 : i32
    %c0_i32_0 = arith.constant 0 : i32
    %c0_i32_1 = arith.constant 0 : i32
    return %arg0, %c0_i32, %c0_i32_0 : i32, i32, i32
  }
}

</mosaic_0001>

<llo_original>
// kernel: tpu_custom_call.1
$region0: #{tpu_custom_call.1}
  #allocation0 [shape = 'u32[]', space=smem, size = 0x4, offset = 0x4, fixed_abs, tag = 'smem constant byte address 0x4 - core index']
  #allocation1 [shape = 'u32[72,128]{1,0:T(1,128)}', space=vmem, size = 0x9000, scoped, tag = 'internal scratch']
  %s0 = inlined_call_operand.hbm [shape: f32[2,64,256], index: 0, kind: input, shape index: {}]
  %s1 = inlined_call_operand.hbm [shape: f32[32,64], index: 1, kind: input, shape index: {}]
  %s2 = inlined_call_operand.vmem [shape: f32[2,32,2], index: 2, kind: output, shape index: {}]
  %s3 = sld [smem:[#allocation0]]
  $region53: #{tpu_custom_call.1} parent=0
    _
  %s5 = ssub.s32 1, %s3
  %s6 = scalar_select 0, %s5, %s3
  $region1: #{tpu_custom_call.1} parent=0
    #allocation2 [shape = 'u8[131072]{0}', space=vmem, size = 0x20000, scoped, tag = 'input window, operand 0']
    #allocation3 [shape = 's32[2]{0}', space=sflag, size = 0x8, scoped, tag = 'scoped memory for tpu_custom_call.1']
    #allocation4 [shape = 'u8[16384]{0}', space=vmem, size = 0x4000, scoped, tag = 'input window, operand 1, single buffered']
    #allocation5 [shape = 's32[1]{0}', space=sflag, size = 0x4, scoped, tag = 'scoped memory for tpu_custom_call.1']
    %7 = vsyncpa [#allocation3], 0
    %s8 = scalar_lea.sflag [#allocation3], 1
    %9 = vsyncpa %s8, 0
    %10 = vsyncpa [#allocation5], 0
    loop: start=0, step=1, limit=4
    $region2: #{tpu_custom_call.1} parent=1 // loop_pre_header
      _
    $region3: #{tpu_custom_call.1} parent=1 // loop_header
      %s12 = sphi 0, %s16
      %p13 = scmp.ge.s32.totalorder %s12, 4
      %s19 = sphi 0, %s31
      %s20 = sphi 0, %s27
      %s21 = sphi 0, %s19
      %s22 = sphi 0, %s20
      %s23 = sphi 0, %s21
      %s24 = sphi 0, %s22
      %s36 = sphi 0, %s38
      %s39 = sphi 0, %s36
      %s40 = sphi 0, %s39
      %s56 = sphi 0, %s40
      %s60 = sphi 0, %s60
      %s62 = sphi 0, %s60
      %s63 = sphi 0, %s62
      %s77 = sphi 0, %s63
      %s83 = sphi 0, %s85
      %s86 = sphi 0, %s83
      %s87 = sphi 0, %s86
      %s103 = sphi 0, %s87
    $region4: #{tpu_custom_call.1} parent=1 // loop_header_branch
      %15 = sbr.rel (%p13) target = $region8
    $region5: #{tpu_custom_call.1} parent=1 // loop_body
      %s17 = ssub.s32 %s12, 1
      %s18 = ssub.s32 %s12, 2
      %s25 = sadd.s32 1, %s20
      %p26 = scmp.ge.s32.totalorder %s25, 1
      %s27 = scalar_select %p26, 0, %s25
      %s28 = sadd.s32 1, %s19
      %s29 = scalar_select %p26, %s28, %s19
      %p30 = scmp.ge.s32.totalorder %s29, 2
      %s31 = scalar_select %p30, 0, %s29
      %s32 = ssub.s32 %s19, %s31
      %s33 = ssub.s32 %s20, %s27
      %s34 = sor.u32 %s32, %s33
      %p35 = scmp.eq.s32.totalorder %s34, 0
      %s37 = sadd.s32 %s36, 1
      %s38 = scalar_select %p35, %s36, %s37
      %p41 = pneg %p35
      %p42 = scmp.eq.s32.totalorder %s12, 1
      %p43 = por %p41, %p42
      %p44 = scmp.ne.s32.totalorder %s36, %s39
      %p45 = scmp.eq.s32.totalorder %s12, 0
      %p46 = por %p44, %p45
      %p47 = scmp.ne.s32.totalorder %s36, %s39
      %p48 = scmp.eq.s32.totalorder %s17, 1
      %p49 = por %p47, %p48
      %p50 = scmp.ne.s32.totalorder %s39, %s40
      %p51 = scmp.eq.s32.totalorder %s17, 0
      %p52 = por %p50, %p51
      %p53 = scmp.ne.s32.totalorder %s39, %s40
      %p54 = scmp.eq.s32.totalorder %s18, 1
      %p55 = por %p53, %p54
      %p57 = scmp.ne.s32.totalorder %s40, %s56
      %p58 = scmp.eq.s32.totalorder %s18, 0
      %p59 = por %p57, %p58
      %s61 = sadd.s32 %s60, 1
      %p64 = scmp.eq.s32.totalorder %s12, 1
      %p65 = scmp.ne.s32.totalorder %s60, %s62
      %p66 = scmp.eq.s32.totalorder %s12, 0
      %p67 = por %p65, %p66
      %p68 = scmp.ne.s32.totalorder %s60, %s62
      %p69 = scmp.eq.s32.totalorder %s17, 1
      %p70 = por %p68, %p69
      %p71 = scmp.ne.s32.totalorder %s62, %s63
      %p72 = scmp.eq.s32.totalorder %s17, 0
      %p73 = por %p71, %p72
      %p74 = scmp.ne.s32.totalorder %s62, %s63
      %p75 = scmp.eq.s32.totalorder %s18, 1
      %p76 = por %p74, %p75
      %p78 = scmp.ne.s32.totalorder %s63, %s77
      %p79 = scmp.eq.s32.totalorder %s18, 0
      %p80 = por %p78, %p79
      %s81 = ssub.s32 %s19, %s31
      %p82 = scmp.eq.s32.totalorder %s81, 0
      %s84 = sadd.s32 %s83, 1
      %s85 = scalar_select %p82, %s83, %s84
      %p88 = pneg %p82
      %p89 = scmp.eq.s32.totalorder %s12, 1
      %p90 = por %p88, %p89
      %p91 = scmp.ne.s32.totalorder %s83, %s86
      %p92 = scmp.eq.s32.totalorder %s12, 0
      %p93 = por %p91, %p92
      %p94 = scmp.ne.s32.totalorder %s83, %s86
      %p95 = scmp.eq.s32.totalorder %s17, 1
      %p96 = por %p94, %p95
      %p97 = scmp.ne.s32.totalorder %s86, %s87
      %p98 = scmp.eq.s32.totalorder %s17, 0
      %p99 = por %p97, %p98
      %p100 = scmp.ne.s32.totalorder %s86, %s87
      %p101 = scmp.eq.s32.totalorder %s18, 1
      %p102 = por %p100, %p101
      %p104 = scmp.ne.s32.totalorder %s87, %s103
      %p105 = scmp.eq.s32.totalorder %s18, 0
      %p106 = por %p104, %p105
      %p107 = scmp.le.s32.totalorder 1, %s12
      %p108 = scmp.lt.s32.totalorder %s12, 3
      %p109 = pnand %p107, %p108
      %p110 = pneg %p109
      // Predicated region
      $region9: #{tpu_custom_call.1} parent=5 // pred_check
        _
      $region10: #{tpu_custom_call.1} parent=5 // pred_check_branch
        %112 = sbr.rel (%p109) target = $region12
      $region11: #{tpu_custom_call.1} parent=5 // pred_region
        %s113 = ssub.s32 %s12, 1
        // Predicated region
        $region13: #{tpu_custom_call.1} parent=11 // pred_check
          %p114 = pneg %p73
        $region14: #{tpu_custom_call.1} parent=11 // pred_check_branch
          %116 = sbr.rel (%p114) target = $region16
        $region15: #{tpu_custom_call.1} parent=11 // pred_region
          %118 = vsyncadd [#allocation5], 0
          %s119 = sshll.u32 %s1, 4
          %s120 = int_to_ptr.hbm [resolvable:$true] %s119
          %s121 = sshll.u32 [#allocation4], 4
          %s122 = int_to_ptr.vmem [resolvable:$true] %s121
          %127 = dma.hbm_to_vmem [thread:$0]  %s120, 512, %s122, [#allocation5], 128, 128, 8
        $region16: #{tpu_custom_call.1} parent=11 // pred_fallthru
          _
      $region12: #{tpu_custom_call.1} parent=5 // pred_fallthru
        _
      %p128 = scmp.lt.s32.totalorder %s12, 2
      // Predicated region
      $region17: #{tpu_custom_call.1} parent=5 // pred_check
        %p129 = pneg %p128
      $region18: #{tpu_custom_call.1} parent=5 // pred_check_branch
        %131 = sbr.rel (%p129) target = $region20
      $region19: #{tpu_custom_call.1} parent=5 // pred_region
        // Predicated region
        $region21: #{tpu_custom_call.1} parent=19 // pred_check
          %p132 = pneg %p46
        $region22: #{tpu_custom_call.1} parent=19 // pred_check_branch
          %134 = sbr.rel (%p132) target = $region24
        $region23: #{tpu_custom_call.1} parent=19 // pred_region
          %s135 = sand.u32 %s36, 1
          %s136 = scalar_lea.sflag [#allocation3], %s135
          %s137 = sand.u32 %s36, 1
          %s138 = smul.addr %s137, 128
          %s139 = scalar_lea.vmem [#allocation2], %s138
          %s140 = smul.u32 2, %s20
          %142 = vsyncadd %s136, 0
          %s143 = smul.addr %s19, 16
          %s144 = sadd.s32 %s140, %s143
          %s145 = smul.addr %s144, 8
          %s146 = scalar_lea.hbm %s0, %s145
          %s147 = sshll.u32 %s146, 4
          %s148 = int_to_ptr.hbm [resolvable:$true] %s147
          %s149 = sshll.u32 %s139, 4
          %s150 = int_to_ptr.vmem [resolvable:$true] %s149
          %155 = dma.hbm_to_vmem [thread:$0]  %s148, 2048, %s150, %s136, 256, 256, 16
        $region24: #{tpu_custom_call.1} parent=19 // pred_fallthru
          _
      $region20: #{tpu_custom_call.1} parent=5 // pred_fallthru
        _
      %p156 = scmp.le.s32.totalorder 1, %s12
      %p157 = scmp.lt.s32.totalorder %s12, 3
      %p158 = pnand %p156, %p157
      %p159 = pneg %p158
      // Predicated region
      $region25: #{tpu_custom_call.1} parent=5 // pred_check
        _
      $region26: #{tpu_custom_call.1} parent=5 // pred_check_branch
        %161 = sbr.rel (%p158) target = $region28
      $region27: #{tpu_custom_call.1} parent=5 // pred_region
        %s162 = ssub.s32 %s12, 1
        %s163 = sand.u32 %s39, 1
        %s164 = scalar_lea.sflag [#allocation3], %s163
        %s165 = sand.u32 %s39, 1
        %s166 = smul.addr %s165, 128
        %s167 = scalar_lea.vmem [#allocation2], %s166
        // Predicated region
        $region29: #{tpu_custom_call.1} parent=27 // pred_check
          %p168 = pneg %p52
        $region30: #{tpu_custom_call.1} parent=27 // pred_check_branch
          %170 = sbr.rel (%p168) target = $region32
        $region31: #{tpu_custom_call.1} parent=27 // pred_region
          %172 = dma.done %s164, 2048
        $region32: #{tpu_custom_call.1} parent=27 // pred_fallthru
          _
        // Predicated region
        $region33: #{tpu_custom_call.1} parent=27 // pred_check
          %p173 = pneg %p73
        $region34: #{tpu_custom_call.1} parent=27 // pred_check_branch
          %175 = sbr.rel (%p173) target = $region36
        $region35: #{tpu_custom_call.1} parent=27 // pred_region
          %177 = dma.done [#allocation5], 512
        $region36: #{tpu_custom_call.1} parent=27 // pred_fallthru
          _
        %s178 = sand.u32 %s39, 1
        %s179 = scalar_lea.sflag [#allocation3], %s178
        %s180 = sand.u32 %s39, 1
        %s181 = smul.addr %s180, 128
        %s182 = scalar_lea.vmem [#allocation2], %s181
        %p183 = pneg %p52
        %p184 = pneg %p49
        %p185 = pneg %p73
        %p186 = pneg %p70
        %p187 = pneg %p99
        %p188 = pneg %p96
        %p189 = scmp.lt.s32.totalorder %s21, 1
        %s190 = scalar_select %p189, %s21, 1
        %s191 = smul.addr %s190, 4
        %s192 = smul.addr %s191, 8
        %s193 = scalar_lea.vmem %s2, %s192
        %s194 = smul.u32 2, %s22
        %p195 = scmp.lt.s32.totalorder %s21, 1
        %s196 = scalar_select %p195, %s21, 1
        %s197 = smul.addr %s196, 4
        %s198 = smul.addr %s197, 8
        %s199 = scalar_lea.vmem %s2, %s198
        %p200 = scmp.eq.s32.totalorder %s22, 0
        // Predicated region
        $region37: #{tpu_custom_call.1} parent=27 // pred_check
          %p201 = pneg %p200
        $region38: #{tpu_custom_call.1} parent=27 // pred_check_branch
          %203 = sbr.rel (%p201) target = $region40
        $region39: #{tpu_custom_call.1} parent=27 // pred_region
          %vm204 = vcmask 15360
          %205 = vst.msk [vmem:[%s199] sm:$0xff] %vm204, 0.0
          %206 = vst.msk [vmem:[%s199 + $0x8] sm:$0xff] %vm204, 0.0
          %207 = vst.msk [vmem:[%s199 + $0x10] sm:$0xff] %vm204, 0.0
          %208 = vst.msk [vmem:[%s199 + $0x18] sm:$0xff] %vm204, 0.0
        $region40: #{tpu_custom_call.1} parent=27 // pred_fallthru
          _
        %v209 = vld [vmem:[%s167] sm:$0xff]
        %v210 = vld [vmem:[%s167 + $0x8] sm:$0xff]
        %v211 = vld [vmem:[%s167 + $0x10] sm:$0xff]
        %v212 = vld [vmem:[%s167 + $0x18] sm:$0xff]
        %v213 = vld [vmem:[%s167 + $0x20] sm:$0xff]
        %v214 = vld [vmem:[%s167 + $0x28] sm:$0xff]
        %v215 = vld [vmem:[%s167 + $0x30] sm:$0xff]
        %v216 = vld [vmem:[%s167 + $0x38] sm:$0xff]
        %v217 = vld [vmem:[%s167 + $0x40] sm:$0xff]
        %v218 = vld [vmem:[%s167 + $0x48] sm:$0xff]
        %v219 = vld [vmem:[%s167 + $0x50] sm:$0xff]
        %v220 = vld [vmem:[%s167 + $0x58] sm:$0xff]
        %v221 = vld [vmem:[%s167 + $0x60] sm:$0xff]
        %v222 = vld [vmem:[%s167 + $0x68] sm:$0xff]
        %v223 = vld [vmem:[%s167 + $0x70] sm:$0xff]
        %v224 = vld [vmem:[%s167 + $0x78] sm:$0xff]
        %v225 = vld [vmem:[#allocation4] sm:$0xff]
        %v226 = vld [vmem:[#allocation4 + $0x8] sm:$0xff]
        %v227 = vld [vmem:[#allocation4 + $0x10] sm:$0xff]
        %v228 = vld [vmem:[#allocation4 + $0x18] sm:$0xff]
        %vm229 = vcmask 523264
        %v231 = vsel %vm229, %v225, 0
        %v234 = vsel %vm229, %v226, 0
        %v237 = vsel %vm229, %v227, 0
        %v240 = vsel %vm229, %v228, 0
        %242 = vmatpush.msra.mxu0 0.0
        %243 = vmatpush.msra.mxu0 0.0
        %244 = vmatpush.msra.mxu0 0.0
        %245 = vmatpush.msra.mxu0 0.0
        %246 = vmatpush.msra.mxu0 0.0
        %247 = vmatpush.msra.mxu0 0.0
        %248 = vmatpush.msra.mxu0 0.0
        %249 = vmatpush.msra.mxu0 0.0
        %250 = vmatpush.msra.mxu0 %v223
        %251 = vmatpush.msra.mxu0 %v221
        %252 = vmatpush.msra.mxu0 %v219
        %253 = vmatpush.msra.mxu0 %v217
        %254 = vmatpush.msra.mxu0 %v215
        %255 = vmatpush.msra.mxu0 %v213
        %256 = vmatpush.msra.mxu0 %v211
        %257 = vmatpush.msra.mxu0 %v209
        %258 = vmatmul.f32.gmra.mxu0 %v231
        %v259 = vpop.f32.mrf.mxu0
        %v260 = vadd.f32 0.0, %v259
        %261 = vmatmul.f32.gmra.mxu0 %v234
        %v262 = vpop.f32.mrf.mxu0
        %v263 = vadd.f32 0.0, %v262
        %264 = vmatmul.f32.gmra.mxu0 %v237
        %v265 = vpop.f32.mrf.mxu0
        %v266 = vadd.f32 0.0, %v265
        %267 = vmatmul.f32.gmra.mxu0 %v240
        %v268 = vpop.f32.mrf.mxu0
        %v269 = vadd.f32 0.0, %v268
        %270 = vdwg.mxu0
        %271 = vmatpush.msra.mxu0 0.0
        %272 = vmatpush.msra.mxu0 0.0
        %273 = vmatpush.msra.mxu0 0.0
        %274 = vmatpush.msra.mxu0 0.0
        %275 = vmatpush.msra.mxu0 0.0
        %276 = vmatpush.msra.mxu0 0.0
        %277 = vmatpush.msra.mxu0 0.0
        %278 = vmatpush.msra.mxu0 0.0
        %279 = vmatpush.msra.mxu0 %v224
        %280 = vmatpush.msra.mxu0 %v222
        %281 = vmatpush.msra.mxu0 %v220
        %282 = vmatpush.msra.mxu0 %v218
        %283 = vmatpush.msra.mxu0 %v216
        %284 = vmatpush.msra.mxu0 %v214
        %285 = vmatpush.msra.mxu0 %v212
        %286 = vmatpush.msra.mxu0 %v210
        %287 = vmatmul.f32.gmra.mxu0 %v231
        %v288 = vpop.f32.mrf.mxu0
        %v289 = vadd.f32 0.0, %v288
        %290 = vmatmul.f32.gmra.mxu0 %v234
        %v291 = vpop.f32.mrf.mxu0
        %v292 = vadd.f32 0.0, %v291
        %293 = vmatmul.f32.gmra.mxu0 %v237
        %v294 = vpop.f32.mrf.mxu0
        %v295 = vadd.f32 0.0, %v294
        %296 = vmatmul.f32.gmra.mxu0 %v240
        %v297 = vpop.f32.mrf.mxu0
        %v298 = vadd.f32 0.0, %v297
        %299 = vdwg.mxu0
        %v300 = vadd.f32 %v260, %v289
        %301 = vadd.xlane.f32.xlu0 %v300
        %v302 = vpop.xlane.xlu0 %301
        %v303 = vadd.f32 %v263, %v292
        %304 = vadd.xlane.f32.xlu0 %v303
        %v305 = vpop.xlane.xlu0 %304
        %v306 = vadd.f32 %v266, %v295
        %307 = vadd.xlane.f32.xlu0 %v306
        %v308 = vpop.xlane.xlu0 %307
        %v309 = vadd.f32 %v269, %v298
        %310 = vadd.xlane.f32.xlu0 %v309
        %v311 = vpop.xlane.xlu0 %310
        %v312 = vmul.f32 %v260, %v260
        %v313 = vmul.f32 %v289, %v289
        %v314 = vmul.f32 %v263, %v263
        %v315 = vmul.f32 %v292, %v292
        %v316 = vmul.f32 %v266, %v266
        %v317 = vmul.f32 %v295, %v295
        %v318 = vmul.f32 %v269, %v269
        %v319 = vmul.f32 %v298, %v298
        %v320 = vadd.f32 %v312, %v313
        %321 = vadd.xlane.f32.xlu0 %v320
        %v322 = vpop.xlane.xlu0 %321
        %v323 = vadd.f32 %v314, %v315
        %324 = vadd.xlane.f32.xlu0 %v323
        %v325 = vpop.xlane.xlu0 %324
        %v326 = vadd.f32 %v316, %v317
        %327 = vadd.xlane.f32.xlu0 %v326
        %v328 = vpop.xlane.xlu0 %327
        %v329 = vadd.f32 %v318, %v319
        %330 = vadd.xlane.f32.xlu0 %v329
        %v331 = vpop.xlane.xlu0 %330
        %v332 = vld [vmem:[%s199] sm:$0xff]
        %v333 = vld [vmem:[%s199 + $0x8] sm:$0xff]
        %v334 = vld [vmem:[%s199 + $0x10] sm:$0xff]
        %v335 = vld [vmem:[%s199 + $0x18] sm:$0xff]
        %vm336 = vcmask 7168
        %v337 = vsel %vm336, %v302, %v322
        %v338 = vsel %vm336, %v305, %v325
        %v339 = vsel %vm336, %v308, %v328
        %v340 = vsel %vm336, %v311, %v331
        %v341 = vadd.f32 %v332, %v337
        %v342 = vadd.f32 %v333, %v338
        %v343 = vadd.f32 %v334, %v339
        %v344 = vadd.f32 %v335, %v340
        %vm345 = vcmask 15360
        %346 = vst.msk [vmem:[%s199] sm:$0xff] %vm345, %v341
        %347 = vst.msk [vmem:[%s199 + $0x8] sm:$0xff] %vm345, %v342
        %348 = vst.msk [vmem:[%s199 + $0x10] sm:$0xff] %vm345, %v343
        %349 = vst.msk [vmem:[%s199 + $0x18] sm:$0xff] %vm345, %v344
        %p350 = scmp.lt.s32.totalorder %s21, 1
        %s351 = scalar_select %p350, %s21, 1
        %s352 = smul.addr %s351, 4
        %s353 = smul.addr %s352, 8
        %s354 = scalar_lea.vmem %s2, %s353
        // Predicated region
        $region41: #{tpu_custom_call.1} parent=27 // pred_check
          %p355 = pneg %p96
        $region42: #{tpu_custom_call.1} parent=27 // pred_check_branch
          %357 = sbr.rel (%p355) target = $region44
        $region43: #{tpu_custom_call.1} parent=27 // pred_region
          _
        $region44: #{tpu_custom_call.1} parent=27 // pred_fallthru
          _
      $region28: #{tpu_custom_call.1} parent=5 // pred_fallthru
        _
      %p358 = scmp.le.s32.totalorder 2, %s12
      // Predicated region
      $region45: #{tpu_custom_call.1} parent=5 // pred_check
        %p359 = pneg %p358
      $region46: #{tpu_custom_call.1} parent=5 // pred_check_branch
        %361 = sbr.rel (%p359) target = $region48
      $region47: #{tpu_custom_call.1} parent=5 // pred_region
        %s362 = ssub.s32 %s12, 2
        // Predicated region
        $region49: #{tpu_custom_call.1} parent=47 // pred_check
          %p363 = pneg %p102
        $region50: #{tpu_custom_call.1} parent=47 // pred_check_branch
          %365 = sbr.rel (%p363) target = $region52
        $region51: #{tpu_custom_call.1} parent=47 // pred_region
          %p366 = scmp.lt.s32.totalorder %s23, 1
          %s367 = scalar_select %p366, %s23, 1
          %s368 = smul.addr %s367, 4
          %s369 = smul.addr %s368, 8
          %s370 = scalar_lea.vmem %s2, %s369
        $region52: #{tpu_custom_call.1} parent=47 // pred_fallthru
          _
      $region48: #{tpu_custom_call.1} parent=5 // pred_fallthru
        _
    $region6: #{tpu_custom_call.1} parent=1 // loop_footer
      %s16 = sadd.s32 1, %s12
    $region7: #{tpu_custom_call.1} parent=1 // loop_footer_branch
      %11 = sbr.rel target = $region3
    $region8: #{tpu_custom_call.1} parent=1 // loop_exit
      _
    %371 = vsyncpa [#allocation3], 1
    %s372 = scalar_lea.sflag [#allocation3], 1
    %373 = vsyncpa %s372, 1
    %374 = vsyncpa [#allocation5], 1

</llo_original>
